<compile_context>
chip_gen: v5e
topology: v5e:2x2
jax: 0.10.0
libtpu: 0.0.40
codegen_flags: <defaults>
</compile_context>

<pallas_src>
from typing import NamedTuple

import jax
import jax.numpy as jnp
from jax.experimental import pallas as pl
from jax.experimental.pallas import tpu as pltpu


FUSED_MAX_N = 1024                       # single fused kernel below this node count
RESIDENT_SUPPORT_MAX_BYTES = 8 * 1024 * 1024   # support slab kept resident if <= 8 MiB
_AGG_VMEM_LIMIT_BYTES = 32 * 1024 * 1024       # raise v5e's 16 MiB default scoped VMEM


def _round_up(n, m):
    return ((n + m - 1) // m) * m


def _select_tiles(n):
    # Large-graph aggregation tiles (512 rows x 1024 reduction cols); shrink for
    # mid-size graphs so padding stays modest.
    tile_n = min(512, _round_up(max(n, 1), 128))
    tile_k = min(1024, _round_up(max(n, 1), 128))
    return tile_n, tile_k


class GCNAdjacency(NamedTuple):
    """Adjacency preprocessed once (hoisted out of the per-layer forward)."""
    adj: jax.Array        # (rows_pad, cols_pad) int8 {0,1} or bf16 (general dense)
    row_scale: jax.Array  # (rows_pad, 1) f32, applied to rows of (adj @ support)
    n: int                # true node count
    fused: bool
    tile_n: int
    tile_k: int


def preprocess_adjacency(adj, *, binary_with_row_norm=True, fuse_max_n=FUSED_MAX_N):
    """One-time adjacency preprocessing (amortized across layers / training steps).

    binary_with_row_norm=True : `adj` is a binary {0,1} adjacency (self-loops included).
        Streamed as int8; exact 1/deg row normalization deferred into the kernel
        epilogue.  Semantics: out = relu(D^-1 A (x W)).
    binary_with_row_norm=False: `adj` is an arbitrary (already-normalized) dense matrix.
        Streamed as bf16; row_scale is 1.  Semantics: out = relu(adj (x W)).
    """
    n = adj.shape[0]
    assert adj.shape == (n, n)
    fused = n <= fuse_max_n
    tile_n, tile_k = _select_tiles(n)
    rows_pad = n if fused else _round_up(n, tile_n)
    cols_pad = n if fused else _round_up(n, tile_k)

    if binary_with_row_norm:
        deg = jnp.maximum(jnp.sum(adj.astype(jnp.float32), axis=1, keepdims=True), 1.0)
        row_scale = 1.0 / deg
        adj_stream = adj.astype(jnp.int8)
    else:
        row_scale = jnp.ones((n, 1), jnp.float32)
        adj_stream = adj.astype(jnp.bfloat16)

    if rows_pad != n or cols_pad != n:
        adj_stream = jnp.pad(adj_stream, ((0, rows_pad - n), (0, cols_pad - n)))
        row_scale = jnp.pad(row_scale, ((0, rows_pad - n), (0, 0)))

    return GCNAdjacency(adj_stream, row_scale, n, fused, tile_n, tile_k)


# ---------------------------------------------------------------------------
# Fused small-graph kernel: out = relu(scale * (adj @ (x @ W)))
# ---------------------------------------------------------------------------
def _fused_kernel(x_ref, w_ref, adj_ref, scale_ref, out_ref):
    support = jnp.dot(x_ref[...], w_ref[...], preferred_element_type=jnp.float32)
    adj = adj_ref[...].astype(jnp.float32)          # int8 {0,1} or bf16 -> f32
    agg = jnp.dot(adj, support, preferred_element_type=jnp.float32)
    out_ref[...] = jnp.maximum(agg * scale_ref[...], 0.0).astype(out_ref.dtype)


def _gcn_fused(x, weight, padj, out_dtype):
    n = padj.n
    Fin = x.shape[1]
    Fout = weight.shape[1]
    return pl.pallas_call(
        _fused_kernel,
        out_shape=jax.ShapeDtypeStruct((n, Fout), out_dtype),
        grid=(1,),
        in_specs=[
            pl.BlockSpec((n, Fin), lambda i: (0, 0)),
            pl.BlockSpec((Fin, Fout), lambda i: (0, 0)),
            pl.BlockSpec((n, n), lambda i: (0, 0)),
            pl.BlockSpec((n, 1), lambda i: (0, 0)),
        ],
        out_specs=pl.BlockSpec((n, Fout), lambda i: (0, 0)),
    )(x, weight, padj.adj, padj.row_scale)


# ---------------------------------------------------------------------------
# Kernel 1 (large graphs): support = x @ W  (bf16 for streaming into kernel 2)
# ---------------------------------------------------------------------------
def _support_kernel(x_ref, w_ref, s_ref):
    s_ref[...] = jnp.dot(
        x_ref[...], w_ref[...], preferred_element_type=jnp.float32
    ).astype(s_ref.dtype)


def _compute_support(x, weight, cols_pad, tile_rows, stream_dtype=jnp.bfloat16):
    n, Fin = x.shape
    Fout = weight.shape[1]
    x_p = jnp.pad(x, ((0, cols_pad - n), (0, 0))) if cols_pad != n else x
    return pl.pallas_call(
        _support_kernel,
        out_shape=jax.ShapeDtypeStruct((cols_pad, Fout), stream_dtype),
        grid_spec=pltpu.PrefetchScalarGridSpec(
            num_scalar_prefetch=0,
            grid=(cols_pad // tile_rows,),
            in_specs=[
                pl.BlockSpec((tile_rows, Fin), lambda i: (i, 0)),
                pl.BlockSpec((Fin, Fout), lambda i: (0, 0)),
            ],
            out_specs=pl.BlockSpec((tile_rows, Fout), lambda i: (i, 0)),
        ),
        compiler_params=pltpu.CompilerParams(dimension_semantics=("parallel",)),
    )(x_p, weight)


# ---------------------------------------------------------------------------
# Kernel 2 (large graphs): out = relu(scale * (adj @ support)), K-tiled.
#   grid = (row_tiles [parallel], k_tiles [arbitrary, innermost])
# ---------------------------------------------------------------------------
def _aggregate_kernel_resident(adj_ref, s_ref, scale_ref, out_ref, acc_ref):
    # `support` is fully resident in VMEM (block index constant -> DMA'd once).
    k = pl.program_id(1)
    tile_k = adj_ref.shape[1]

    @pl.when(k == 0)
    def _():
        acc_ref[...] = jnp.zeros_like(acc_ref)

    start = pl.multiple_of(k * tile_k, tile_k)
    s_tile = s_ref[pl.ds(start, tile_k), :]
    # int8 {0,1} (or bf16) adj tile -> bf16 via f32 (cheap VPU casts; kernel is HBM-bound).
    adj_bf16 = adj_ref[...].astype(jnp.float32).astype(jnp.bfloat16)
    acc_ref[...] += jnp.dot(adj_bf16, s_tile, preferred_element_type=jnp.float32)

    @pl.when(k == pl.num_programs(1) - 1)
    def _():
        out_ref[...] = jnp.maximum(
            acc_ref[...] * scale_ref[...], 0.0
        ).astype(out_ref.dtype)


def _aggregate_kernel_streamed(adj_ref, s_ref, scale_ref, out_ref, acc_ref):
    # `support` streamed one (tile_k, Fout) block per reduction step.
    k = pl.program_id(1)

    @pl.when(k == 0)
    def _():
        acc_ref[...] = jnp.zeros_like(acc_ref)

    adj_bf16 = adj_ref[...].astype(jnp.float32).astype(jnp.bfloat16)
    acc_ref[...] += jnp.dot(adj_bf16, s_ref[...], preferred_element_type=jnp.float32)

    @pl.when(k == pl.num_programs(1) - 1)
    def _():
        out_ref[...] = jnp.maximum(
            acc_ref[...] * scale_ref[...], 0.0
        ).astype(out_ref.dtype)


def _gcn_tiled(x, weight, padj, out_dtype, support_resident):
    n = padj.n
    Fout = weight.shape[1]
    tile_n, tile_k = padj.tile_n, padj.tile_k
    rows_pad, cols_pad = padj.adj.shape

    support = _compute_support(x, weight, cols_pad, tile_k)

    if support_resident is None:
        support_bytes = cols_pad * Fout * support.dtype.itemsize
        support_resident = support_bytes <= RESIDENT_SUPPORT_MAX_BYTES

    if support_resident:
        kernel = _aggregate_kernel_resident
        s_spec = pl.BlockSpec((cols_pad, Fout), lambda i, k: (0, 0))  # DMA'd once
    else:
        kernel = _aggregate_kernel_streamed
        s_spec = pl.BlockSpec((tile_k, Fout), lambda i, k: (k, 0))

    grid = (rows_pad // tile_n, cols_pad // tile_k)
    out = pl.pallas_call(
        kernel,
        out_shape=jax.ShapeDtypeStruct((rows_pad, Fout), out_dtype),
        grid_spec=pltpu.PrefetchScalarGridSpec(
            num_scalar_prefetch=0,
            grid=grid,
            in_specs=[
                # adj tile (int8) is the long-pole HBM stream.
                # (If xprof shows exposed DMA, add pipeline_mode=pl.Buffered(3) here only.)
                pl.BlockSpec((tile_n, tile_k), lambda i, k: (i, k)),
                s_spec,
                pl.BlockSpec((tile_n, 1), lambda i, k: (i, 0)),
            ],
            out_specs=pl.BlockSpec((tile_n, Fout), lambda i, k: (i, 0)),
            scratch_shapes=[pltpu.VMEM((tile_n, Fout), jnp.float32)],
        ),
        compiler_params=pltpu.CompilerParams(
            dimension_semantics=("parallel", "arbitrary"),
            vmem_limit_bytes=_AGG_VMEM_LIMIT_BYTES,
        ),
    )(padj.adj, support, padj.row_scale)
    return out[:n] if rows_pad != n else out


def graph_convolution(x, weight, padj, *, out_dtype=jnp.float32,
                      support_resident=None):
    """relu(row_scale * (adj @ (dropout(x) @ weight))); dropout p=0.0 -> identity.

    out_dtype=jnp.bfloat16 halves output writeback (accumulation stays f32)."""
    n = padj.n
    assert x.shape[0] == n
    if padj.fused:
        return _gcn_fused(x, weight, padj, out_dtype)
    return _gcn_tiled(x, weight, padj, out_dtype, support_resident)


def xavier_uniform(key, fan_in, fan_out, dtype=jnp.float32):
    limit = (6.0 / (fan_in + fan_out)) ** 0.5
    return jax.random.uniform(key, (fan_in, fan_out), dtype=dtype,
                              minval=-limit, maxval=limit)


if __name__ == "__main__":
    # Small shapes consistent with the module: N nodes, in_features -> out_features.
    N, IN_FEATURES, OUT_FEATURES = 256, 64, 128

    key = jax.random.PRNGKey(0)
    kx, kadj, kw = jax.random.split(key, 3)

    x = jax.random.normal(kx, (N, IN_FEATURES), dtype=jnp.float32)
    weight = xavier_uniform(kw, IN_FEATURES, OUT_FEATURES)

    # Binary adjacency with self-loops; row normalization handled by preprocessing.
    adj_bin = ((jax.random.uniform(kadj, (N, N)) < 0.05)
               | jnp.eye(N, dtype=bool)).astype(jnp.float32)
    deg = jnp.sum(adj_bin, axis=1, keepdims=True)
    adj_norm = adj_bin / deg

    # Reference (plain JAX, f32).
    ref = jax.nn.relu(adj_norm @ (x @ weight))

    results = []

    # Path 1: fused single-kernel (default for small graphs), binary int8 adj.
    padj_fused = preprocess_adjacency(adj_bin)
    results.append(("fused_binary",
                    jax.block_until_ready(graph_convolution(x, weight, padj_fused))))

    # Path 2: fused kernel with a general (already-normalized) dense bf16 adj.
    padj_dense = preprocess_adjacency(adj_norm, binary_with_row_norm=False)
    results.append(("fused_dense",
                    jax.block_until_ready(graph_convolution(x, weight, padj_dense))))

    # Path 3: large-graph tiled path, support resident in VMEM (force tiled via fuse_max_n=0).
    padj_tiled = preprocess_adjacency(adj_bin, fuse_max_n=0)
    results.append(("tiled_resident",
                    jax.block_until_ready(
                        graph_convolution(x, weight, padj_tiled, support_resident=True))))

    # Path 4: tiled path with streamed support and bf16 output writeback.
    results.append(("tiled_streamed_bf16",
                    jax.block_until_ready(
                        graph_convolution(x, weight, padj_tiled,
                                          support_resident=False,
                                          out_dtype=jnp.bfloat16))))

    for name, out in results:
        assert out.shape == (N, OUT_FEATURES), (name, out.shape)
        out_f32 = out.astype(jnp.float32)
        max_err = float(jnp.max(jnp.abs(out_f32 - ref)))
        assert jnp.allclose(out_f32, ref, atol=3e-2, rtol=3e-2), (name, max_err)

    print("KERNEL_OK")
</pallas_src>

<mosaic_0001>
module attributes {stable_mosaic.version = 11 : i64} {
  func.func @_fused_kernel(%arg0: i32, %arg1: memref<256x64xf32, #tpu.memory_space<vmem>>, %arg2: memref<64x128xf32, #tpu.memory_space<vmem>>, %arg3: memref<256x256xi8, #tpu.memory_space<vmem>>, %arg4: memref<256x1xf32, #tpu.memory_space<vmem>>, %arg5: memref<256x128xf32, #tpu.memory_space<vmem>>) attributes {dimension_semantics = [#tpu.dimension_semantics<arbitrary>], iteration_bounds = array<i64: 1>, scalar_prefetch = 0 : i64, scratch_operands = 0 : i64, tpu.core_type = #tpu.core_type<tc>, window_params = [{pipeline_mode = #tpu.pipeline_mode<synchronous>, transform_indices = @transform_0, window_bounds = array<i64: 256, 64>}, {pipeline_mode = #tpu.pipeline_mode<synchronous>, transform_indices = @transform_1, window_bounds = array<i64: 64, 128>}, {pipeline_mode = #tpu.pipeline_mode<synchronous>, transform_indices = @transform_2, window_bounds = array<i64: 256, 256>}, {pipeline_mode = #tpu.pipeline_mode<synchronous>, transform_indices = @transform_3, window_bounds = array<i64: 256, 1>}, {pipeline_mode = #tpu.pipeline_mode<synchronous>, transform_indices = @transform_4, window_bounds = array<i64: 256, 128>}]} {
    %c0 = arith.constant 0 : index
    %c0_0 = arith.constant 0 : index
    %0 = vector.load %arg1[%c0, %c0_0] : memref<256x64xf32, #tpu.memory_space<vmem>>, vector<256x64xf32>
    %c0_1 = arith.constant 0 : index
    %c0_2 = arith.constant 0 : index
    %1 = vector.load %arg2[%c0_1, %c0_2] : memref<64x128xf32, #tpu.memory_space<vmem>>, vector<64x128xf32>
    %cst = arith.constant dense<0.000000e+00> : vector<256x128xf32>
    %2 = tpu.matmul %0, %1, %cst {dimension_numbers = #tpu.dot_dimension_numbers<[1], [0], [0], [1], [0, 0, 1, 1], [], []>} : vector<256x64xf32>, vector<64x128xf32>, vector<256x128xf32> -> vector<256x128xf32>
    %c0_3 = arith.constant 0 : index
    %c0_4 = arith.constant 0 : index
    %3 = vector.load %arg3[%c0_3, %c0_4] : memref<256x256xi8, #tpu.memory_space<vmem>>, vector<256x256xi8>
    %4 = arith.sitofp %3 : vector<256x256xi8> to vector<256x256xf32>
    %cst_5 = arith.constant dense<0.000000e+00> : vector<256x128xf32>
    %5 = tpu.matmul %4, %2, %cst_5 {dimension_numbers = #tpu.dot_dimension_numbers<[1], [0], [0], [1], [0, 0, 1, 1], [], []>} : vector<256x256xf32>, vector<256x128xf32>, vector<256x128xf32> -> vector<256x128xf32>
    %c0_6 = arith.constant 0 : index
    %c0_7 = arith.constant 0 : index
    %6 = vector.load %arg4[%c0_6, %c0_7] : memref<256x1xf32, #tpu.memory_space<vmem>>, vector<256x1xf32>
    %7 = vector.broadcast %6 : vector<256x1xf32> to vector<256x128xf32>
    %8 = arith.mulf %5, %7 : vector<256x128xf32>
    %cst_8 = arith.constant 0.000000e+00 : f32
    %9 = vector.broadcast %cst_8 : f32 to vector<256x128xf32>
    %10 = arith.maximumf %8, %9 : vector<256x128xf32>
    %c0_9 = arith.constant 0 : index
    %c0_10 = arith.constant 0 : index
    %11 = vector.load %arg5[%c0_9, %c0_10] : memref<256x128xf32, #tpu.memory_space<vmem>>, vector<256x128xf32>
    tpu.vector_store %arg5[%c0_9, %c0_10], %10 {strides = array<i32>} : memref<256x128xf32, #tpu.memory_space<vmem>>, vector<256x128xf32>,
    return
  }
  func.func @transform_0(%arg0: i32) -> (i32, i32) {
    %c0_i32 = arith.constant 0 : i32
    %c0_i32_0 = arith.constant 0 : i32
    %c0_i32_1 = arith.constant 0 : i32
    return %c0_i32, %c0_i32_0 : i32, i32
  }
  func.func @transform_1(%arg0: i32) -> (i32, i32) {
    %c0_i32 = arith.constant 0 : i32
    %c0_i32_0 = arith.constant 0 : i32
    %c0_i32_1 = arith.constant 0 : i32
    return %c0_i32, %c0_i32_0 : i32, i32
  }
  func.func @transform_2(%arg0: i32) -> (i32, i32) {
    %c0_i32 = arith.constant 0 : i32
    %c0_i32_0 = arith.constant 0 : i32
    %c0_i32_1 = arith.constant 0 : i32
    return %c0_i32, %c0_i32_0 : i32, i32
  }
  func.func @transform_3(%arg0: i32) -> (i32, i32) {
    %c0_i32 = arith.constant 0 : i32
    %c0_i32_0 = arith.constant 0 : i32
    %c0_i32_1 = arith.constant 0 : i32
    return %c0_i32, %c0_i32_0 : i32, i32
  }
  func.func @transform_4(%arg0: i32) -> (i32, i32) {
    %c0_i32 = arith.constant 0 : i32
    %c0_i32_0 = arith.constant 0 : i32
    %c0_i32_1 = arith.constant 0 : i32
    return %c0_i32, %c0_i32_0 : i32, i32
  }
}

</mosaic_0001>

<llo_original>
// kernel: tpu_custom_call.1
$region0: #{tpu_custom_call.1}
  #allocation0 [shape = 'u32[]', space=smem, size = 0x4, offset = 0x4, fixed_abs, tag = 'smem constant byte address 0x4 - core index']
  #allocation1 [shape = 'u32[72,128]{1,0:T(1,128)}', space=vmem, size = 0x9000, scoped, tag = 'internal scratch']
  %s0 = inlined_call_operand.vmem [shape: f32[256,64], index: 0, kind: input, shape index: {}]
  %s1 = inlined_call_operand.vmem [shape: f32[64,128], index: 1, kind: input, shape index: {}]
  %s2 = inlined_call_operand.vmem [shape: s8[256,256], index: 2, kind: input, shape index: {}]
  %s3 = inlined_call_operand.vmem [shape: f32[256,1], index: 3, kind: input, shape index: {}]
  %s4 = inlined_call_operand.hbm [shape: f32[256,128], index: 4, kind: output, shape index: {}]
  %s5 = sld [smem:[#allocation0]]
  $region26: #{tpu_custom_call.1} parent=0
    _
  %s7 = ssub.s32 1, %s5
  %s8 = scalar_select 0, %s7, %s5
  $region1: #{tpu_custom_call.1} parent=0
    #allocation2 [shape = 'u8[131072]{0}', space=vmem, size = 0x20000, scoped, tag = 'output window, operand 0, single buffered']
    #allocation3 [shape = 's32[1]{0}', space=sflag, size = 0x4, scoped, tag = 'scoped memory for tpu_custom_call.1']
    %9 = vsyncpa [#allocation3], 0
    // Predicated region
    $region2: #{tpu_custom_call.1} parent=1 // pred_check
      _
    $region3: #{tpu_custom_call.1} parent=1 // pred_check_branch
      %11 = sbr.rel (0) target = $region5
    $region4: #{tpu_custom_call.1} parent=1 // pred_region
      _
    $region5: #{tpu_custom_call.1} parent=1 // pred_fallthru
      _
    // Predicated region
    $region6: #{tpu_custom_call.1} parent=1 // pred_check
      _
    $region7: #{tpu_custom_call.1} parent=1 // pred_check_branch
      %13 = sbr.rel (0) target = $region9
    $region8: #{tpu_custom_call.1} parent=1 // pred_region
      _
    $region9: #{tpu_custom_call.1} parent=1 // pred_fallthru
      _
    // Predicated region
    $region10: #{tpu_custom_call.1} parent=1 // pred_check
      _
    $region11: #{tpu_custom_call.1} parent=1 // pred_check_branch
      %15 = sbr.rel (0) target = $region13
    $region12: #{tpu_custom_call.1} parent=1 // pred_region
      _
    $region13: #{tpu_custom_call.1} parent=1 // pred_fallthru
      _
    // Predicated region
    $region14: #{tpu_custom_call.1} parent=1 // pred_check
      _
    $region15: #{tpu_custom_call.1} parent=1 // pred_check_branch
      %17 = sbr.rel (0) target = $region17
    $region16: #{tpu_custom_call.1} parent=1 // pred_region
      _
    $region17: #{tpu_custom_call.1} parent=1 // pred_fallthru
      _
    %v18 = vld [vmem:[%s0] sm:$0xff]
    %v19 = vld [vmem:[%s0 + $0x8] sm:$0xff]
    %v20 = vld [vmem:[%s0 + $0x10] sm:$0xff]
    %v21 = vld [vmem:[%s0 + $0x18] sm:$0xff]
    %v22 = vld [vmem:[%s0 + $0x20] sm:$0xff]
    %v23 = vld [vmem:[%s0 + $0x28] sm:$0xff]
    %v24 = vld [vmem:[%s0 + $0x30] sm:$0xff]
    %v25 = vld [vmem:[%s0 + $0x38] sm:$0xff]
    %v26 = vld [vmem:[%s0 + $0x40] sm:$0xff]
    %v27 = vld [vmem:[%s0 + $0x48] sm:$0xff]
    %v28 = vld [vmem:[%s0 + $0x50] sm:$0xff]
    %v29 = vld [vmem:[%s0 + $0x58] sm:$0xff]
    %v30 = vld [vmem:[%s0 + $0x60] sm:$0xff]
    %v31 = vld [vmem:[%s0 + $0x68] sm:$0xff]
    %v32 = vld [vmem:[%s0 + $0x70] sm:$0xff]
    %v33 = vld [vmem:[%s0 + $0x78] sm:$0xff]
    %v34 = vld [vmem:[%s0 + $0x80] sm:$0xff]
    %v35 = vld [vmem:[%s0 + $0x88] sm:$0xff]
    %v36 = vld [vmem:[%s0 + $0x90] sm:$0xff]
    %v37 = vld [vmem:[%s0 + $0x98] sm:$0xff]
    %v38 = vld [vmem:[%s0 + $0xa0] sm:$0xff]
    %v39 = vld [vmem:[%s0 + $0xa8] sm:$0xff]
    %v40 = vld [vmem:[%s0 + $0xb0] sm:$0xff]
    %v41 = vld [vmem:[%s0 + $0xb8] sm:$0xff]
    %v42 = vld [vmem:[%s0 + $0xc0] sm:$0xff]
    %v43 = vld [vmem:[%s0 + $0xc8] sm:$0xff]
    %v44 = vld [vmem:[%s0 + $0xd0] sm:$0xff]
    %v45 = vld [vmem:[%s0 + $0xd8] sm:$0xff]
    %v46 = vld [vmem:[%s0 + $0xe0] sm:$0xff]
    %v47 = vld [vmem:[%s0 + $0xe8] sm:$0xff]
    %v48 = vld [vmem:[%s0 + $0xf0] sm:$0xff]
    %v49 = vld [vmem:[%s0 + $0xf8] sm:$0xff]
    %v50 = vld [vmem:[%s1] sm:$0xff]
    %v51 = vld [vmem:[%s1 + $0x8] sm:$0xff]
    %v52 = vld [vmem:[%s1 + $0x10] sm:$0xff]
    %v53 = vld [vmem:[%s1 + $0x18] sm:$0xff]
    %v54 = vld [vmem:[%s1 + $0x20] sm:$0xff]
    %v55 = vld [vmem:[%s1 + $0x28] sm:$0xff]
    %v56 = vld [vmem:[%s1 + $0x30] sm:$0xff]
    %v57 = vld [vmem:[%s1 + $0x38] sm:$0xff]
    %vm58 = vcmask 523264
    %v60 = vsel %vm58, %v18, 0
    %v63 = vsel %vm58, %v19, 0
    %v66 = vsel %vm58, %v20, 0
    %v69 = vsel %vm58, %v21, 0
    %v72 = vsel %vm58, %v22, 0
    %v75 = vsel %vm58, %v23, 0
    %v78 = vsel %vm58, %v24, 0
    %v81 = vsel %vm58, %v25, 0
    %v84 = vsel %vm58, %v26, 0
    %v87 = vsel %vm58, %v27, 0
    %v90 = vsel %vm58, %v28, 0
    %v93 = vsel %vm58, %v29, 0
    %v96 = vsel %vm58, %v30, 0
    %v99 = vsel %vm58, %v31, 0
    %v102 = vsel %vm58, %v32, 0
    %v105 = vsel %vm58, %v33, 0
    %v108 = vsel %vm58, %v34, 0
    %v111 = vsel %vm58, %v35, 0
    %v114 = vsel %vm58, %v36, 0
    %v117 = vsel %vm58, %v37, 0
    %v120 = vsel %vm58, %v38, 0
    %v123 = vsel %vm58, %v39, 0
    %v126 = vsel %vm58, %v40, 0
    %v129 = vsel %vm58, %v41, 0
    %v132 = vsel %vm58, %v42, 0
    %v135 = vsel %vm58, %v43, 0
    %v138 = vsel %vm58, %v44, 0
    %v141 = vsel %vm58, %v45, 0
    %v144 = vsel %vm58, %v46, 0
    %v147 = vsel %vm58, %v47, 0
    %v150 = vsel %vm58, %v48, 0
    %v153 = vsel %vm58, %v49, 0
    %155 = vmatpush.msra.mxu0 0.0
    %156 = vmatpush.msra.mxu0 0.0
    %157 = vmatpush.msra.mxu0 0.0
    %158 = vmatpush.msra.mxu0 0.0
    %159 = vmatpush.msra.mxu0 0.0
    %160 = vmatpush.msra.mxu0 0.0
    %161 = vmatpush.msra.mxu0 0.0
    %162 = vmatpush.msra.mxu0 0.0
    %163 = vmatpush.msra.mxu0 %v57
    %164 = vmatpush.msra.mxu0 %v56
    %165 = vmatpush.msra.mxu0 %v55
    %166 = vmatpush.msra.mxu0 %v54
    %167 = vmatpush.msra.mxu0 %v53
    %168 = vmatpush.msra.mxu0 %v52
    %169 = vmatpush.msra.mxu0 %v51
    %170 = vmatpush.msra.mxu0 %v50
    %171 = vmatmul.f32.gmra.mxu0 %v60
    %v172 = vpop.f32.mrf.mxu0
    %v173 = vadd.f32 0.0, %v172
    %174 = vmatmul.f32.gmra.mxu0 %v63
    %v175 = vpop.f32.mrf.mxu0
    %v176 = vadd.f32 0.0, %v175
    %177 = vmatmul.f32.gmra.mxu0 %v66
    %v178 = vpop.f32.mrf.mxu0
    %v179 = vadd.f32 0.0, %v178
    %180 = vmatmul.f32.gmra.mxu0 %v69
    %v181 = vpop.f32.mrf.mxu0
    %v182 = vadd.f32 0.0, %v181
    %183 = vmatmul.f32.gmra.mxu0 %v72
    %v184 = vpop.f32.mrf.mxu0
    %v185 = vadd.f32 0.0, %v184
    %186 = vmatmul.f32.gmra.mxu0 %v75
    %v187 = vpop.f32.mrf.mxu0
    %v188 = vadd.f32 0.0, %v187
    %189 = vmatmul.f32.gmra.mxu0 %v78
    %v190 = vpop.f32.mrf.mxu0
    %v191 = vadd.f32 0.0, %v190
    %192 = vmatmul.f32.gmra.mxu0 %v81
    %v193 = vpop.f32.mrf.mxu0
    %v194 = vadd.f32 0.0, %v193
    %195 = vmatmul.f32.gmra.mxu0 %v84
    %v196 = vpop.f32.mrf.mxu0
    %v197 = vadd.f32 0.0, %v196
    %198 = vmatmul.f32.gmra.mxu0 %v87
    %v199 = vpop.f32.mrf.mxu0
    %v200 = vadd.f32 0.0, %v199
    %201 = vmatmul.f32.gmra.mxu0 %v90
    %v202 = vpop.f32.mrf.mxu0
    %v203 = vadd.f32 0.0, %v202
    %204 = vmatmul.f32.gmra.mxu0 %v93
    %v205 = vpop.f32.mrf.mxu0
    %v206 = vadd.f32 0.0, %v205
    %207 = vmatmul.f32.gmra.mxu0 %v96
    %v208 = vpop.f32.mrf.mxu0
    %v209 = vadd.f32 0.0, %v208
    %210 = vmatmul.f32.gmra.mxu0 %v99
    %v211 = vpop.f32.mrf.mxu0
    %v212 = vadd.f32 0.0, %v211
    %213 = vmatmul.f32.gmra.mxu0 %v102
    %v214 = vpop.f32.mrf.mxu0
    %v215 = vadd.f32 0.0, %v214
    %216 = vmatmul.f32.gmra.mxu0 %v105
    %v217 = vpop.f32.mrf.mxu0
    %v218 = vadd.f32 0.0, %v217
    %219 = vmatmul.f32.gmra.mxu0 %v108
    %v220 = vpop.f32.mrf.mxu0
    %v221 = vadd.f32 0.0, %v220
    %222 = vmatmul.f32.gmra.mxu0 %v111
    %v223 = vpop.f32.mrf.mxu0
    %v224 = vadd.f32 0.0, %v223
    %225 = vmatmul.f32.gmra.mxu0 %v114
    %v226 = vpop.f32.mrf.mxu0
    %v227 = vadd.f32 0.0, %v226
    %228 = vmatmul.f32.gmra.mxu0 %v117
    %v229 = vpop.f32.mrf.mxu0
    %v230 = vadd.f32 0.0, %v229
    %231 = vmatmul.f32.gmra.mxu0 %v120
    %v232 = vpop.f32.mrf.mxu0
    %v233 = vadd.f32 0.0, %v232
    %234 = vmatmul.f32.gmra.mxu0 %v123
    %v235 = vpop.f32.mrf.mxu0
    %v236 = vadd.f32 0.0, %v235
    %237 = vmatmul.f32.gmra.mxu0 %v126
    %v238 = vpop.f32.mrf.mxu0
    %v239 = vadd.f32 0.0, %v238
    %240 = vmatmul.f32.gmra.mxu0 %v129
    %v241 = vpop.f32.mrf.mxu0
    %v242 = vadd.f32 0.0, %v241
    %243 = vmatmul.f32.gmra.mxu0 %v132
    %v244 = vpop.f32.mrf.mxu0
    %v245 = vadd.f32 0.0, %v244
    %246 = vmatmul.f32.gmra.mxu0 %v135
    %v247 = vpop.f32.mrf.mxu0
    %v248 = vadd.f32 0.0, %v247
    %249 = vmatmul.f32.gmra.mxu0 %v138
    %v250 = vpop.f32.mrf.mxu0
    %v251 = vadd.f32 0.0, %v250
    %252 = vmatmul.f32.gmra.mxu0 %v141
    %v253 = vpop.f32.mrf.mxu0
    %v254 = vadd.f32 0.0, %v253
    %255 = vmatmul.f32.gmra.mxu0 %v144
    %v256 = vpop.f32.mrf.mxu0
    %v257 = vadd.f32 0.0, %v256
    %258 = vmatmul.f32.gmra.mxu0 %v147
    %v259 = vpop.f32.mrf.mxu0
    %v260 = vadd.f32 0.0, %v259
    %261 = vmatmul.f32.gmra.mxu0 %v150
    %v262 = vpop.f32.mrf.mxu0
    %v263 = vadd.f32 0.0, %v262
    %264 = vmatmul.f32.gmra.mxu0 %v153
    %v265 = vpop.f32.mrf.mxu0
    %v266 = vadd.f32 0.0, %v265
    %267 = vdwg.mxu0
    %v268 = vld [vmem:[%s2] sm:$0xff]
    %v269 = vld [vmem:[%s2 + $0x8] sm:$0xff]
    %v270 = vld [vmem:[%s2 + $0x10] sm:$0xff]
    %v271 = vld [vmem:[%s2 + $0x18] sm:$0xff]
    %v272 = vld [vmem:[%s2 + $0x20] sm:$0xff]
    %v273 = vld [vmem:[%s2 + $0x28] sm:$0xff]
    %v274 = vld [vmem:[%s2 + $0x30] sm:$0xff]
    %v275 = vld [vmem:[%s2 + $0x38] sm:$0xff]
    %v276 = vld [vmem:[%s2 + $0x40] sm:$0xff]
    %v277 = vld [vmem:[%s2 + $0x48] sm:$0xff]
    %v278 = vld [vmem:[%s2 + $0x50] sm:$0xff]
    %v279 = vld [vmem:[%s2 + $0x58] sm:$0xff]
    %v280 = vld [vmem:[%s2 + $0x60] sm:$0xff]
    %v281 = vld [vmem:[%s2 + $0x68] sm:$0xff]
    %v282 = vld [vmem:[%s2 + $0x70] sm:$0xff]
    %v283 = vld [vmem:[%s2 + $0x78] sm:$0xff]
    %v284 = vunpack.c.0.s8 %v268
    %v285 = vunpack.c.0.s8 %v269
    %v286 = vunpack.c.1.s8 %v268
    %v287 = vunpack.c.1.s8 %v269
    %v288 = vunpack.c.2.s8 %v268
    %v289 = vunpack.c.2.s8 %v269
    %v290 = vunpack.c.3.s8 %v268
    %v291 = vunpack.c.3.s8 %v269
    %v292 = vunpack.c.0.s8 %v270
    %v293 = vunpack.c.0.s8 %v271
    %v294 = vunpack.c.1.s8 %v270
    %v295 = vunpack.c.1.s8 %v271
    %v296 = vunpack.c.2.s8 %v270
    %v297 = vunpack.c.2.s8 %v271
    %v298 = vunpack.c.3.s8 %v270
    %v299 = vunpack.c.3.s8 %v271
    %v300 = vunpack.c.0.s8 %v272
    %v301 = vunpack.c.0.s8 %v273
    %v302 = vunpack.c.1.s8 %v272
    %v303 = vunpack.c.1.s8 %v273
    %v304 = vunpack.c.2.s8 %v272
    %v305 = vunpack.c.2.s8 %v273
    %v306 = vunpack.c.3.s8 %v272
    %v307 = vunpack.c.3.s8 %v273
    %v308 = vunpack.c.0.s8 %v274
    %v309 = vunpack.c.0.s8 %v275
    %v310 = vunpack.c.1.s8 %v274
    %v311 = vunpack.c.1.s8 %v275
    %v312 = vunpack.c.2.s8 %v274
    %v313 = vunpack.c.2.s8 %v275
    %v314 = vunpack.c.3.s8 %v274
    %v315 = vunpack.c.3.s8 %v275
    %v316 = vunpack.c.0.s8 %v276
    %v317 = vunpack.c.0.s8 %v277
    %v318 = vunpack.c.1.s8 %v276
    %v319 = vunpack.c.1.s8 %v277
    %v320 = vunpack.c.2.s8 %v276
    %v321 = vunpack.c.2.s8 %v277
    %v322 = vunpack.c.3.s8 %v276
    %v323 = vunpack.c.3.s8 %v277
    %v324 = vunpack.c.0.s8 %v278
    %v325 = vunpack.c.0.s8 %v279
    %v326 = vunpack.c.1.s8 %v278
    %v327 = vunpack.c.1.s8 %v279
    %v328 = vunpack.c.2.s8 %v278
    %v329 = vunpack.c.2.s8 %v279
    %v330 = vunpack.c.3.s8 %v278
    %v331 = vunpack.c.3.s8 %v279
    %v332 = vunpack.c.0.s8 %v280
    %v333 = vunpack.c.0.s8 %v281
    %v334 = vunpack.c.1.s8 %v280
    %v335 = vunpack.c.1.s8 %v281
    %v336 = vunpack.c.2.s8 %v280
    %v337 = vunpack.c.2.s8 %v281
    %v338 = vunpack.c.3.s8 %v280
    %v339 = vunpack.c.3.s8 %v281
    %v340 = vunpack.c.0.s8 %v282
    %v341 = vunpack.c.0.s8 %v283
    %v342 = vunpack.c.1.s8 %v282
    %v343 = vunpack.c.1.s8 %v283
    %v344 = vunpack.c.2.s8 %v282
    %v345 = vunpack.c.2.s8 %v283
    %v346 = vunpack.c.3.s8 %v282
    %v347 = vunpack.c.3.s8 %v283
    %v348 = vcvt.s32.f32 %v284
    %v349 = vcvt.s32.f32 %v285
    %v350 = vcvt.s32.f32 %v286
    %v351 = vcvt.s32.f32 %v287
    %v352 = vcvt.s32.f32 %v288
    %v353 = vcvt.s32.f32 %v289
    %v354 = vcvt.s32.f32 %v290
    %v355 = vcvt.s32.f32 %v291
    %v356 = vcvt.s32.f32 %v292
    %v357 = vcvt.s32.f32 %v293
    %v358 = vcvt.s32.f32 %v294
    %v359 = vcvt.s32.f32 %v295
    %v360 = vcvt.s32.f32 %v296
    %v361 = vcvt.s32.f32 %v297
    %v362 = vcvt.s32.f32 %v298
    %v363 = vcvt.s32.f32 %v299
    %v364 = vcvt.s32.f32 %v300
    %v365 = vcvt.s32.f32 %v301
    %v366 = vcvt.s32.f32 %v302
    %v367 = vcvt.s32.f32 %v303
    %v368 = vcvt.s32.f32 %v304
    %v369 = vcvt.s32.f32 %v305
    %v370 = vcvt.s32.f32 %v306
    %v371 = vcvt.s32.f32 %v307
    %v372 = vcvt.s32.f32 %v308
    %v373 = vcvt.s32.f32 %v309
    %v374 = vcvt.s32.f32 %v310
    %v375 = vcvt.s32.f32 %v311
    %v376 = vcvt.s32.f32 %v312
    %v377 = vcvt.s32.f32 %v313
    %v378 = vcvt.s32.f32 %v314
    %v379 = vcvt.s32.f32 %v315
    %v380 = vcvt.s32.f32 %v316
    %v381 = vcvt.s32.f32 %v317
    %v382 = vcvt.s32.f32 %v318
    %v383 = vcvt.s32.f32 %v319
    %v384 = vcvt.s32.f32 %v320
    %v385 = vcvt.s32.f32 %v321
    %v386 = vcvt.s32.f32 %v322
    %v387 = vcvt.s32.f32 %v323
    %v388 = vcvt.s32.f32 %v324
    %v389 = vcvt.s32.f32 %v325
    %v390 = vcvt.s32.f32 %v326
    %v391 = vcvt.s32.f32 %v327
    %v392 = vcvt.s32.f32 %v328
    %v393 = vcvt.s32.f32 %v329
    %v394 = vcvt.s32.f32 %v330
    %v395 = vcvt.s32.f32 %v331
    %v396 = vcvt.s32.f32 %v332
    %v397 = vcvt.s32.f32 %v333
    %v398 = vcvt.s32.f32 %v334
    %v399 = vcvt.s32.f32 %v335
    %v400 = vcvt.s32.f32 %v336
    %v401 = vcvt.s32.f32 %v337
    %v402 = vcvt.s32.f32 %v338
    %v403 = vcvt.s32.f32 %v339
    %v404 = vcvt.s32.f32 %v340
    %v405 = vcvt.s32.f32 %v341
    %v406 = vcvt.s32.f32 %v342
    %v407 = vcvt.s32.f32 %v343
    %v408 = vcvt.s32.f32 %v344
    %v409 = vcvt.s32.f32 %v345
    %v410 = vcvt.s32.f32 %v346
    %v411 = vcvt.s32.f32 %v347
    %412 = vmatpush.msra.mxu0 %v218
    %413 = vmatpush.msra.mxu0 %v215
    %414 = vmatpush.msra.mxu0 %v212
    %415 = vmatpush.msra.mxu0 %v209
    %416 = vmatpush.msra.mxu0 %v206
    %417 = vmatpush.msra.mxu0 %v203
    %418 = vmatpush.msra.mxu0 %v200
    %419 = vmatpush.msra.mxu0 %v197
    %420 = vmatpush.msra.mxu0 %v194
    %421 = vmatpush.msra.mxu0 %v191
    %422 = vmatpush.msra.mxu0 %v188
    %423 = vmatpush.msra.mxu0 %v185
    %424 = vmatpush.msra.mxu0 %v182
    %425 = vmatpush.msra.mxu0 %v179
    %426 = vmatpush.msra.mxu0 %v176
    %427 = vmatpush.msra.mxu0 %v173
    %428 = vmatmul.f32.gmra.mxu0 %v348
    %v429 = vpop.f32.mrf.mxu0
    %v430 = vadd.f32 0.0, %v429
    %431 = vmatmul.f32.gmra.mxu0 %v350
    %v432 = vpop.f32.mrf.mxu0
    %v433 = vadd.f32 0.0, %v432
    %434 = vmatmul.f32.gmra.mxu0 %v352
    %v435 = vpop.f32.mrf.mxu0
    %v436 = vadd.f32 0.0, %v435
    %437 = vmatmul.f32.gmra.mxu0 %v354
    %v438 = vpop.f32.mrf.mxu0
    %v439 = vadd.f32 0.0, %v438
    %440 = vmatmul.f32.gmra.mxu0 %v356
    %v441 = vpop.f32.mrf.mxu0
    %v442 = vadd.f32 0.0, %v441
    %443 = vmatmul.f32.gmra.mxu0 %v358
    %v444 = vpop.f32.mrf.mxu0
    %v445 = vadd.f32 0.0, %v444
    %446 = vmatmul.f32.gmra.mxu0 %v360
    %v447 = vpop.f32.mrf.mxu0
    %v448 = vadd.f32 0.0, %v447
    %449 = vmatmul.f32.gmra.mxu0 %v362
    %v450 = vpop.f32.mrf.mxu0
    %v451 = vadd.f32 0.0, %v450
    %452 = vmatmul.f32.gmra.mxu0 %v364
    %v453 = vpop.f32.mrf.mxu0
    %v454 = vadd.f32 0.0, %v453
    %455 = vmatmul.f32.gmra.mxu0 %v366
    %v456 = vpop.f32.mrf.mxu0
    %v457 = vadd.f32 0.0, %v456
    %458 = vmatmul.f32.gmra.mxu0 %v368
    %v459 = vpop.f32.mrf.mxu0
    %v460 = vadd.f32 0.0, %v459
    %461 = vmatmul.f32.gmra.mxu0 %v370
    %v462 = vpop.f32.mrf.mxu0
    %v463 = vadd.f32 0.0, %v462
    %464 = vmatmul.f32.gmra.mxu0 %v372
    %v465 = vpop.f32.mrf.mxu0
    %v466 = vadd.f32 0.0, %v465
    %467 = vmatmul.f32.gmra.mxu0 %v374
    %v468 = vpop.f32.mrf.mxu0
    %v469 = vadd.f32 0.0, %v468
    %470 = vmatmul.f32.gmra.mxu0 %v376
    %v471 = vpop.f32.mrf.mxu0
    %v472 = vadd.f32 0.0, %v471
    %473 = vmatmul.f32.gmra.mxu0 %v378
    %v474 = vpop.f32.mrf.mxu0
    %v475 = vadd.f32 0.0, %v474
    %476 = vmatmul.f32.gmra.mxu0 %v380
    %v477 = vpop.f32.mrf.mxu0
    %v478 = vadd.f32 0.0, %v477
    %479 = vmatmul.f32.gmra.mxu0 %v382
    %v480 = vpop.f32.mrf.mxu0
    %v481 = vadd.f32 0.0, %v480
    %482 = vmatmul.f32.gmra.mxu0 %v384
    %v483 = vpop.f32.mrf.mxu0
    %v484 = vadd.f32 0.0, %v483
    %485 = vmatmul.f32.gmra.mxu0 %v386
    %v486 = vpop.f32.mrf.mxu0
    %v487 = vadd.f32 0.0, %v486
    %488 = vmatmul.f32.gmra.mxu0 %v388
    %v489 = vpop.f32.mrf.mxu0
    %v490 = vadd.f32 0.0, %v489
    %491 = vmatmul.f32.gmra.mxu0 %v390
    %v492 = vpop.f32.mrf.mxu0
    %v493 = vadd.f32 0.0, %v492
    %494 = vmatmul.f32.gmra.mxu0 %v392
    %v495 = vpop.f32.mrf.mxu0
    %v496 = vadd.f32 0.0, %v495
    %497 = vmatmul.f32.gmra.mxu0 %v394
    %v498 = vpop.f32.mrf.mxu0
    %v499 = vadd.f32 0.0, %v498
    %500 = vmatmul.f32.gmra.mxu0 %v396
    %v501 = vpop.f32.mrf.mxu0
    %v502 = vadd.f32 0.0, %v501
    %503 = vmatmul.f32.gmra.mxu0 %v398
    %v504 = vpop.f32.mrf.mxu0
    %v505 = vadd.f32 0.0, %v504
    %506 = vmatmul.f32.gmra.mxu0 %v400
    %v507 = vpop.f32.mrf.mxu0
    %v508 = vadd.f32 0.0, %v507
    %509 = vmatmul.f32.gmra.mxu0 %v402
    %v510 = vpop.f32.mrf.mxu0
    %v511 = vadd.f32 0.0, %v510
    %512 = vmatmul.f32.gmra.mxu0 %v404
    %v513 = vpop.f32.mrf.mxu0
    %v514 = vadd.f32 0.0, %v513
    %515 = vmatmul.f32.gmra.mxu0 %v406
    %v516 = vpop.f32.mrf.mxu0
    %v517 = vadd.f32 0.0, %v516
    %518 = vmatmul.f32.gmra.mxu0 %v408
    %v519 = vpop.f32.mrf.mxu0
    %v520 = vadd.f32 0.0, %v519
    %521 = vmatmul.f32.gmra.mxu0 %v410
    %v522 = vpop.f32.mrf.mxu0
    %v523 = vadd.f32 0.0, %v522
    %524 = vdwg.mxu0
    %525 = vmatpush.msra.mxu0 %v266
    %526 = vmatpush.msra.mxu0 %v263
    %527 = vmatpush.msra.mxu0 %v260
    %528 = vmatpush.msra.mxu0 %v257
    %529 = vmatpush.msra.mxu0 %v254
    %530 = vmatpush.msra.mxu0 %v251
    %531 = vmatpush.msra.mxu0 %v248
    %532 = vmatpush.msra.mxu0 %v245
    %533 = vmatpush.msra.mxu0 %v242
    %534 = vmatpush.msra.mxu0 %v239
    %535 = vmatpush.msra.mxu0 %v236
    %536 = vmatpush.msra.mxu0 %v233
    %537 = vmatpush.msra.mxu0 %v230
    %538 = vmatpush.msra.mxu0 %v227
    %539 = vmatpush.msra.mxu0 %v224
    %540 = vmatpush.msra.mxu0 %v221
    %541 = vmatmul.f32.gmra.mxu0 %v349
    %v542 = vpop.f32.mrf.mxu0
    %v543 = vadd.f32 %v430, %v542
    %544 = vmatmul.f32.gmra.mxu0 %v351
    %v545 = vpop.f32.mrf.mxu0
    %v546 = vadd.f32 %v433, %v545
    %547 = vmatmul.f32.gmra.mxu0 %v353
    %v548 = vpop.f32.mrf.mxu0
    %v549 = vadd.f32 %v436, %v548
    %550 = vmatmul.f32.gmra.mxu0 %v355
    %v551 = vpop.f32.mrf.mxu0
    %v552 = vadd.f32 %v439, %v551
    %553 = vmatmul.f32.gmra.mxu0 %v357
    %v554 = vpop.f32.mrf.mxu0
    %v555 = vadd.f32 %v442, %v554
    %556 = vmatmul.f32.gmra.mxu0 %v359
    %v557 = vpop.f32.mrf.mxu0
    %v558 = vadd.f32 %v445, %v557
    %559 = vmatmul.f32.gmra.mxu0 %v361
    %v560 = vpop.f32.mrf.mxu0
    %v561 = vadd.f32 %v448, %v560
    %562 = vmatmul.f32.gmra.mxu0 %v363
    %v563 = vpop.f32.mrf.mxu0
    %v564 = vadd.f32 %v451, %v563
    %565 = vmatmul.f32.gmra.mxu0 %v365
    %v566 = vpop.f32.mrf.mxu0
    %v567 = vadd.f32 %v454, %v566
    %568 = vmatmul.f32.gmra.mxu0 %v367
    %v569 = vpop.f32.mrf.mxu0
    %v570 = vadd.f32 %v457, %v569
    %571 = vmatmul.f32.gmra.mxu0 %v369
    %v572 = vpop.f32.mrf.mxu0
    %v573 = vadd.f32 %v460, %v572
    %574 = vmatmul.f32.gmra.mxu0 %v371
    %v575 = vpop.f32.mrf.mxu0
    %v576 = vadd.f32 %v463, %v575
    %577 = vmatmul.f32.gmra.mxu0 %v373
    %v578 = vpop.f32.mrf.mxu0
    %v579 = vadd.f32 %v466, %v578
    %580 = vmatmul.f32.gmra.mxu0 %v375
    %v581 = vpop.f32.mrf.mxu0
    %v582 = vadd.f32 %v469, %v581
    %583 = vmatmul.f32.gmra.mxu0 %v377
    %v584 = vpop.f32.mrf.mxu0
    %v585 = vadd.f32 %v472, %v584
    %586 = vmatmul.f32.gmra.mxu0 %v379
    %v587 = vpop.f32.mrf.mxu0
    %v588 = vadd.f32 %v475, %v587
    %589 = vmatmul.f32.gmra.mxu0 %v381
    %v590 = vpop.f32.mrf.mxu0
    %v591 = vadd.f32 %v478, %v590
    %592 = vmatmul.f32.gmra.mxu0 %v383
    %v593 = vpop.f32.mrf.mxu0
    %v594 = vadd.f32 %v481, %v593
    %595 = vmatmul.f32.gmra.mxu0 %v385
    %v596 = vpop.f32.mrf.mxu0
    %v597 = vadd.f32 %v484, %v596
    %598 = vmatmul.f32.gmra.mxu0 %v387
    %v599 = vpop.f32.mrf.mxu0
    %v600 = vadd.f32 %v487, %v599
    %601 = vmatmul.f32.gmra.mxu0 %v389
    %v602 = vpop.f32.mrf.mxu0
    %v603 = vadd.f32 %v490, %v602
    %604 = vmatmul.f32.gmra.mxu0 %v391
    %v605 = vpop.f32.mrf.mxu0
    %v606 = vadd.f32 %v493, %v605
    %607 = vmatmul.f32.gmra.mxu0 %v393
    %v608 = vpop.f32.mrf.mxu0
    %v609 = vadd.f32 %v496, %v608
    %610 = vmatmul.f32.gmra.mxu0 %v395
    %v611 = vpop.f32.mrf.mxu0
    %v612 = vadd.f32 %v499, %v611
    %613 = vmatmul.f32.gmra.mxu0 %v397
    %v614 = vpop.f32.mrf.mxu0
    %v615 = vadd.f32 %v502, %v614
    %616 = vmatmul.f32.gmra.mxu0 %v399
    %v617 = vpop.f32.mrf.mxu0
    %v618 = vadd.f32 %v505, %v617
    %619 = vmatmul.f32.gmra.mxu0 %v401
    %v620 = vpop.f32.mrf.mxu0
    %v621 = vadd.f32 %v508, %v620
    %622 = vmatmul.f32.gmra.mxu0 %v403
    %v623 = vpop.f32.mrf.mxu0
    %v624 = vadd.f32 %v511, %v623
    %625 = vmatmul.f32.gmra.mxu0 %v405
    %v626 = vpop.f32.mrf.mxu0
    %v627 = vadd.f32 %v514, %v626
    %628 = vmatmul.f32.gmra.mxu0 %v407
    %v629 = vpop.f32.mrf.mxu0
    %v630 = vadd.f32 %v517, %v629
    %631 = vmatmul.f32.gmra.mxu0 %v409
    %v632 = vpop.f32.mrf.mxu0
    %v633 = vadd.f32 %v520, %v632
    %634 = vmatmul.f32.gmra.mxu0 %v411
    %v635 = vpop.f32.mrf.mxu0
    %v636 = vadd.f32 %v523, %v635
    %637 = vdwg.mxu0
    %v638 = vld [vmem:[%s3] sm:$0xff]
    %v639 = vld [vmem:[%s3 + $0x8] sm:$0xff]
    %v640 = vld [vmem:[%s3 + $0x10] sm:$0xff]
    %v641 = vld [vmem:[%s3 + $0x18] sm:$0xff]
    %v642 = vld [vmem:[%s3 + $0x20] sm:$0xff]
    %v643 = vld [vmem:[%s3 + $0x28] sm:$0xff]
    %v644 = vld [vmem:[%s3 + $0x30] sm:$0xff]
    %v645 = vld [vmem:[%s3 + $0x38] sm:$0xff]
    %v646 = vld [vmem:[%s3 + $0x40] sm:$0xff]
    %v647 = vld [vmem:[%s3 + $0x48] sm:$0xff]
    %v648 = vld [vmem:[%s3 + $0x50] sm:$0xff]
    %v649 = vld [vmem:[%s3 + $0x58] sm:$0xff]
    %v650 = vld [vmem:[%s3 + $0x60] sm:$0xff]
    %v651 = vld [vmem:[%s3 + $0x68] sm:$0xff]
    %v652 = vld [vmem:[%s3 + $0x70] sm:$0xff]
    %v653 = vld [vmem:[%s3 + $0x78] sm:$0xff]
    %v654 = vld [vmem:[%s3 + $0x80] sm:$0xff]
    %v655 = vld [vmem:[%s3 + $0x88] sm:$0xff]
    %v656 = vld [vmem:[%s3 + $0x90] sm:$0xff]
    %v657 = vld [vmem:[%s3 + $0x98] sm:$0xff]
    %v658 = vld [vmem:[%s3 + $0xa0] sm:$0xff]
    %v659 = vld [vmem:[%s3 + $0xa8] sm:$0xff]
    %v660 = vld [vmem:[%s3 + $0xb0] sm:$0xff]
    %v661 = vld [vmem:[%s3 + $0xb8] sm:$0xff]
    %v662 = vld [vmem:[%s3 + $0xc0] sm:$0xff]
    %v663 = vld [vmem:[%s3 + $0xc8] sm:$0xff]
    %v664 = vld [vmem:[%s3 + $0xd0] sm:$0xff]
    %v665 = vld [vmem:[%s3 + $0xd8] sm:$0xff]
    %v666 = vld [vmem:[%s3 + $0xe0] sm:$0xff]
    %v667 = vld [vmem:[%s3 + $0xe8] sm:$0xff]
    %v668 = vld [vmem:[%s3 + $0xf0] sm:$0xff]
    %v669 = vld [vmem:[%s3 + $0xf8] sm:$0xff]
    %671 = vset.pattern.permute.xlu0 0
    %672 = vperm.xlu0 %671, %v638
    %v673 = vpop.permute.xlu0 %672
    %676 = vset.pattern.permute.xlu0 0
    %677 = vperm.xlu0 %676, %v639
    %v678 = vpop.permute.xlu0 %677
    %681 = vset.pattern.permute.xlu0 0
    %682 = vperm.xlu0 %681, %v640
    %v683 = vpop.permute.xlu0 %682
    %686 = vset.pattern.permute.xlu0 0
    %687 = vperm.xlu0 %686, %v641
    %v688 = vpop.permute.xlu0 %687
    %691 = vset.pattern.permute.xlu0 0
    %692 = vperm.xlu0 %691, %v642
    %v693 = vpop.permute.xlu0 %692
    %696 = vset.pattern.permute.xlu0 0
    %697 = vperm.xlu0 %696, %v643
    %v698 = vpop.permute.xlu0 %697
    %701 = vset.pattern.permute.xlu0 0
    %702 = vperm.xlu0 %701, %v644
    %v703 = vpop.permute.xlu0 %702
    %706 = vset.pattern.permute.xlu0 0
    %707 = vperm.xlu0 %706, %v645
    %v708 = vpop.permute.xlu0 %707
    %711 = vset.pattern.permute.xlu0 0
    %712 = vperm.xlu0 %711, %v646
    %v713 = vpop.permute.xlu0 %712
    %716 = vset.pattern.permute.xlu0 0
    %717 = vperm.xlu0 %716, %v647
    %v718 = vpop.permute.xlu0 %717
    %721 = vset.pattern.permute.xlu0 0
    %722 = vperm.xlu0 %721, %v648
    %v723 = vpop.permute.xlu0 %722
    %726 = vset.pattern.permute.xlu0 0
    %727 = vperm.xlu0 %726, %v649
    %v728 = vpop.permute.xlu0 %727
    %731 = vset.pattern.permute.xlu0 0
    %732 = vperm.xlu0 %731, %v650
    %v733 = vpop.permute.xlu0 %732
    %736 = vset.pattern.permute.xlu0 0
    %737 = vperm.xlu0 %736, %v651
    %v738 = vpop.permute.xlu0 %737
    %741 = vset.pattern.permute.xlu0 0
    %742 = vperm.xlu0 %741, %v652
    %v743 = vpop.permute.xlu0 %742
    %746 = vset.pattern.permute.xlu0 0
    %747 = vperm.xlu0 %746, %v653
    %v748 = vpop.permute.xlu0 %747
    %751 = vset.pattern.permute.xlu0 0
    %752 = vperm.xlu0 %751, %v654
    %v753 = vpop.permute.xlu0 %752
    %756 = vset.pattern.permute.xlu0 0
    %757 = vperm.xlu0 %756, %v655
    %v758 = vpop.permute.xlu0 %757
    %761 = vset.pattern.permute.xlu0 0
    %762 = vperm.xlu0 %761, %v656
    %v763 = vpop.permute.xlu0 %762
    %766 = vset.pattern.permute.xlu0 0
    %767 = vperm.xlu0 %766, %v657
    %v768 = vpop.permute.xlu0 %767
    %771 = vset.pattern.permute.xlu0 0
    %772 = vperm.xlu0 %771, %v658
    %v773 = vpop.permute.xlu0 %772
    %776 = vset.pattern.permute.xlu0 0
    %777 = vperm.xlu0 %776, %v659
    %v778 = vpop.permute.xlu0 %777
    %781 = vset.pattern.permute.xlu0 0
    %782 = vperm.xlu0 %781, %v660
    %v783 = vpop.permute.xlu0 %782
    %786 = vset.pattern.permute.xlu0 0
    %787 = vperm.xlu0 %786, %v661
    %v788 = vpop.permute.xlu0 %787
    %791 = vset.pattern.permute.xlu0 0
    %792 = vperm.xlu0 %791, %v662
    %v793 = vpop.permute.xlu0 %792
    %796 = vset.pattern.permute.xlu0 0
    %797 = vperm.xlu0 %796, %v663
    %v798 = vpop.permute.xlu0 %797
    %801 = vset.pattern.permute.xlu0 0
    %802 = vperm.xlu0 %801, %v664
    %v803 = vpop.permute.xlu0 %802
    %806 = vset.pattern.permute.xlu0 0
    %807 = vperm.xlu0 %806, %v665
    %v808 = vpop.permute.xlu0 %807
    %811 = vset.pattern.permute.xlu0 0
    %812 = vperm.xlu0 %811, %v666
    %v813 = vpop.permute.xlu0 %812
    %816 = vset.pattern.permute.xlu0 0
    %817 = vperm.xlu0 %816, %v667
    %v818 = vpop.permute.xlu0 %817
    %821 = vset.pattern.permute.xlu0 0
    %822 = vperm.xlu0 %821, %v668
    %v823 = vpop.permute.xlu0 %822
    %826 = vset.pattern.permute.xlu0 0
    %827 = vperm.xlu0 %826, %v669
    %v828 = vpop.permute.xlu0 %827
    %v830 = vmul.f32 %v543, %v673
    %v831 = vmul.f32 %v546, %v678
    %v832 = vmul.f32 %v549, %v683
    %v833 = vmul.f32 %v552, %v688
    %v834 = vmul.f32 %v555, %v693
    %v835 = vmul.f32 %v558, %v698
    %v836 = vmul.f32 %v561, %v703
    %v837 = vmul.f32 %v564, %v708
    %v838 = vmul.f32 %v567, %v713
    %v839 = vmul.f32 %v570, %v718
    %v840 = vmul.f32 %v573, %v723
    %v841 = vmul.f32 %v576, %v728
    %v842 = vmul.f32 %v579, %v733
    %v843 = vmul.f32 %v582, %v738
    %v844 = vmul.f32 %v585, %v743
    %v845 = vmul.f32 %v588, %v748
    %v846 = vmul.f32 %v591, %v753
    %v847 = vmul.f32 %v594, %v758
    %v848 = vmul.f32 %v597, %v763
    %v849 = vmul.f32 %v600, %v768
    %v850 = vmul.f32 %v603, %v773
    %v851 = vmul.f32 %v606, %v778
    %v852 = vmul.f32 %v609, %v783
    %v853 = vmul.f32 %v612, %v788
    %v854 = vmul.f32 %v615, %v793
    %v855 = vmul.f32 %v618, %v798
    %v856 = vmul.f32 %v621, %v803
    %v857 = vmul.f32 %v624, %v808
    %v858 = vmul.f32 %v627, %v813
    %v859 = vmul.f32 %v630, %v818
    %v860 = vmul.f32 %v633, %v823
    %v861 = vmul.f32 %v636, %v828
    %v862 = vmax.f32 %v830, 0.0
    %v863 = vmax.f32 %v831, 0.0
    %v864 = vmax.f32 %v832, 0.0
    %v865 = vmax.f32 %v833, 0.0
    %v866 = vmax.f32 %v834, 0.0
    %v867 = vmax.f32 %v835, 0.0
    %v868 = vmax.f32 %v836, 0.0
    %v869 = vmax.f32 %v837, 0.0
    %v870 = vmax.f32 %v838, 0.0
    %v871 = vmax.f32 %v839, 0.0
    %v872 = vmax.f32 %v840, 0.0
    %v873 = vmax.f32 %v841, 0.0
    %v874 = vmax.f32 %v842, 0.0
    %v875 = vmax.f32 %v843, 0.0
    %v876 = vmax.f32 %v844, 0.0
    %v877 = vmax.f32 %v845, 0.0
    %v878 = vmax.f32 %v846, 0.0
    %v879 = vmax.f32 %v847, 0.0
    %v880 = vmax.f32 %v848, 0.0
    %v881 = vmax.f32 %v849, 0.0
    %v882 = vmax.f32 %v850, 0.0
    %v883 = vmax.f32 %v851, 0.0
    %v884 = vmax.f32 %v852, 0.0
    %v885 = vmax.f32 %v853, 0.0
    %v886 = vmax.f32 %v854, 0.0
    %v887 = vmax.f32 %v855, 0.0
    %v888 = vmax.f32 %v856, 0.0
    %v889 = vmax.f32 %v857, 0.0
    %v890 = vmax.f32 %v858, 0.0
    %v891 = vmax.f32 %v859, 0.0
    %v892 = vmax.f32 %v860, 0.0
    %v893 = vmax.f32 %v861, 0.0
    %894 = vst [vmem:[#allocation2] sm:$0xff] %v862
    %895 = vst [vmem:[#allocation2 + $0x8] sm:$0xff] %v863
    %896 = vst [vmem:[#allocation2 + $0x10] sm:$0xff] %v864
    %897 = vst [vmem:[#allocation2 + $0x18] sm:$0xff] %v865
    %898 = vst [vmem:[#allocation2 + $0x20] sm:$0xff] %v866
    %899 = vst [vmem:[#allocation2 + $0x28] sm:$0xff] %v867
    %900 = vst [vmem:[#allocation2 + $0x30] sm:$0xff] %v868
    %901 = vst [vmem:[#allocation2 + $0x38] sm:$0xff] %v869
    %902 = vst [vmem:[#allocation2 + $0x40] sm:$0xff] %v870
    %903 = vst [vmem:[#allocation2 + $0x48] sm:$0xff] %v871
    %904 = vst [vmem:[#allocation2 + $0x50] sm:$0xff] %v872
    %905 = vst [vmem:[#allocation2 + $0x58] sm:$0xff] %v873
    %906 = vst [vmem:[#allocation2 + $0x60] sm:$0xff] %v874
    %907 = vst [vmem:[#allocation2 + $0x68] sm:$0xff] %v875
    %908 = vst [vmem:[#allocation2 + $0x70] sm:$0xff] %v876
    %909 = vst [vmem:[#allocation2 + $0x78] sm:$0xff] %v877
    %910 = vst [vmem:[#allocation2 + $0x80] sm:$0xff] %v878
    %911 = vst [vmem:[#allocation2 + $0x88] sm:$0xff] %v879
    %912 = vst [vmem:[#allocation2 + $0x90] sm:$0xff] %v880
    %913 = vst [vmem:[#allocation2 + $0x98] sm:$0xff] %v881
    %914 = vst [vmem:[#allocation2 + $0xa0] sm:$0xff] %v882
    %915 = vst [vmem:[#allocation2 + $0xa8] sm:$0xff] %v883
    %916 = vst [vmem:[#allocation2 + $0xb0] sm:$0xff] %v884
    %917 = vst [vmem:[#allocation2 + $0xb8] sm:$0xff] %v885
    %918 = vst [vmem:[#allocation2 + $0xc0] sm:$0xff] %v886
    %919 = vst [vmem:[#allocation2 + $0xc8] sm:$0xff] %v887
    %920 = vst [vmem:[#allocation2 + $0xd0] sm:$0xff] %v888
    %921 = vst [vmem:[#allocation2 + $0xd8] sm:$0xff] %v889
    %922 = vst [vmem:[#allocation2 + $0xe0] sm:$0xff] %v890
    %923 = vst [vmem:[#allocation2 + $0xe8] sm:$0xff] %v891
    %924 = vst [vmem:[#allocation2 + $0xf0] sm:$0xff] %v892
    %925 = vst [vmem:[#allocation2 + $0xf8] sm:$0xff] %v893
    // Predicated region
    $region18: #{tpu_custom_call.1} parent=1 // pred_check
      _
    $region19: #{tpu_custom_call.1} parent=1 // pred_check_branch
      %927 = sbr.rel (0) target = $region21
    $region20: #{tpu_custom_call.1} parent=1 // pred_region
      %929 = vsyncadd [#allocation3], 0
      %s930 = sshll.u32 [#allocation2], 4
      %s931 = int_to_ptr.vmem [resolvable:$true] %s930
      %s932 = sshll.u32 %s4, 4
      %s933 = int_to_ptr.hbm [resolvable:$true] %s932
      %938 = dma.vmem_to_hbm [thread:$0]  %s931, 4096, %s933, [#allocation3], 128, 128, 8
    $region21: #{tpu_custom_call.1} parent=1 // pred_fallthru
      _
    // Predicated region
    $region22: #{tpu_custom_call.1} parent=1 // pred_check
      _
    $region23: #{tpu_custom_call.1} parent=1 // pred_check_branch
      %940 = sbr.rel (0) target = $region25
    $region24: #{tpu_custom_call.1} parent=1 // pred_region
      %942 = dma.done [#allocation3], 4096
    $region25: #{tpu_custom_call.1} parent=1 // pred_fallthru
      _
    %943 = vsyncpa [#allocation3], 1

</llo_original>
